<compile_context>
chip_gen: v7x
topology: tpu7x:2x2x1
jax: 0.10.0
libtpu: 0.0.40
codegen_flags: <defaults>
</compile_context>

<pallas_src>
import functools

import jax
import jax.numpy as jnp
from jax.experimental import pallas as pl
from jax.experimental.pallas import tpu as pltpu

LANE = 128  # TPU lane width; every packed stripe / output slab is a multiple of this.


def ppo_actor_kernel(in_ref, wa_ref, b1_ref,
                     wih_ref, bi_ref, bhn_ref,
                     w2t_ref, b2_ref,
                     out_ref, *, in_pad):
    """One batch tile of the PPOActor forward pass.

    Wrapper-prepared layouts (all zero-padded to 128-lane stripes):
      in   : (TB, in_pad + 128)   lanes [0:in_dim] = obs, lanes [in_pad:in_pad+H] = h_in
      wa   : (in_pad + 128, 512)  block-diag [[fc1_w^T, 0], [0, Whr^T|Whz^T|Whn^T]]
      b1   : (1, 128)
      wih  : (128, 384) = [Wir^T | Wiz^T | Win^T]   (one 128-lane stripe per gate)
      bi   : (1, 384)   = [b_ir+b_hr | b_iz+b_hz | b_in]
      bhn  : (1, 128)   (kept separate: it is scaled by r)
      w2t  : (128, 128)           b2 : (1, 128)
      out  : (TB, 256)  lanes [0:128] = h_new, lanes [128:256] = q
    """
    xin = in_ref[...]
    h_in = xin[:, in_pad:in_pad + LANE]

    # Fused fc1 + GRU hidden-side matmul: [x_pre | gh] = [obs | h] @ wa.
    fused = jnp.dot(xin, wa_ref[...], preferred_element_type=jnp.float32)
    x = jnp.maximum(fused[:, 0:LANE] + b1_ref[...], 0.0)          # relu(fc1(obs))
    gh = fused[:, LANE:4 * LANE]                                   # (TB, 384)

    # GRU input-side gates (PyTorch gate order r, z, n), one packed matmul.
    gi = jnp.dot(x, wih_ref[...], preferred_element_type=jnp.float32) + bi_ref[...]

    r = jax.nn.sigmoid(gi[:, 0 * LANE:1 * LANE] + gh[:, 0 * LANE:1 * LANE])
    z = jax.nn.sigmoid(gi[:, 1 * LANE:2 * LANE] + gh[:, 1 * LANE:2 * LANE])
    n = jnp.tanh(gi[:, 2 * LANE:3 * LANE]
                 + r * (gh[:, 2 * LANE:3 * LANE] + bhn_ref[...]))
    h_new = (1.0 - z) * n + z * h_in

    # fc2 (zero-padded weights => padded lanes of h_new contribute nothing).
    q = jnp.dot(h_new, w2t_ref[...], preferred_element_type=jnp.float32) + b2_ref[...]

    # Single lane-dense output slab: unmasked 128-wide stores.
    out_ref[:, 0:LANE] = h_new
    out_ref[:, LANE:2 * LANE] = q


def _round_up(x, m):
    return (x + m - 1) // m * m


@functools.partial(jax.jit, static_argnames=("rnn_hidden_dim",))
def ppo_actor_forward(obs, hidden_state, params, *, rnn_hidden_dim):
    """Runs the PPOActor forward pass. Returns (q, h)."""
    H = rnn_hidden_dim
    in_dim = obs.shape[-1]
    n_actions = params["fc2_w"].shape[0]
    assert H <= LANE and n_actions <= LANE, "single-stripe packing assumes H, n_actions <= 128"

    f32 = jnp.float32
    # Glue: mimic `hidden_state.reshape(-1, H)` from the PyTorch forward.
    h_in = hidden_state.reshape(-1, H)
    B = obs.shape[0]

    # ---- batch tiling (grid over B, TILE_B multiple of 8) -------------------
    tile_b = min(512, _round_up(B, 8))
    B_pad = _round_up(B, tile_b)
    in_pad = _round_up(in_dim, LANE)

    # One lane-dense input slab: [obs (padded to in_pad) | h_in (padded to 128)].
    slab = jnp.zeros((B_pad, in_pad + LANE), f32)
    slab = slab.at[:B, :in_dim].set(obs.astype(f32))
    slab = slab.at[:B, in_pad:in_pad + H].set(h_in.astype(f32))

    # ---- pack / pad parameters (plain-JAX glue, done once per call) ---------
    w_ih = params["gru_w_ih"]   # (3H, H), gate order r, z, n
    w_hh = params["gru_w_hh"]   # (3H, H)
    b_ih = params["gru_b_ih"]   # (3H,)
    b_hh = params["gru_b_hh"]   # (3H,)

    # Block-diagonal fused weight: columns [0:128] = fc1^T, [128:512] = Whh^T stripes.
    wa = jnp.zeros((in_pad + LANE, 4 * LANE), f32)
    wa = wa.at[:in_dim, :H].set(params["fc1_w"].T.astype(f32))
    wih = jnp.zeros((LANE, 3 * LANE), f32)
    for g in range(3):
        wa = wa.at[in_pad:in_pad + H,
                   LANE + g * LANE:LANE + g * LANE + H].set(
                       w_hh[g * H:(g + 1) * H].T.astype(f32))
        wih = wih.at[:H, g * LANE:g * LANE + H].set(
            w_ih[g * H:(g + 1) * H].T.astype(f32))

    b1 = jnp.zeros((1, LANE), f32).at[:, :H].set(params["fc1_b"].astype(f32))

    # Fold b_ir+b_hr and b_iz+b_hz; keep b_in in the slab, b_hn separate (scaled by r).
    bi = jnp.zeros((1, 3 * LANE), f32)
    bi = bi.at[0, 0 * LANE:0 * LANE + H].set((b_ih[0:H] + b_hh[0:H]).astype(f32))
    bi = bi.at[0, 1 * LANE:1 * LANE + H].set((b_ih[H:2 * H] + b_hh[H:2 * H]).astype(f32))
    bi = bi.at[0, 2 * LANE:2 * LANE + H].set(b_ih[2 * H:3 * H].astype(f32))
    bhn = jnp.zeros((1, LANE), f32).at[:, :H].set(b_hh[2 * H:3 * H].astype(f32))

    w2t = jnp.zeros((LANE, LANE), f32).at[:H, :n_actions].set(params["fc2_w"].T.astype(f32))
    b2 = jnp.zeros((1, LANE), f32).at[:, :n_actions].set(params["fc2_b"].astype(f32))

    # ---- pallas call ---------------------------------------------------------
    def batch_spec(shape):
        return pl.BlockSpec(shape, lambda i: (i, 0))

    def resident_spec(shape):
        return pl.BlockSpec(shape, lambda i: (0, 0))

    kernel = functools.partial(ppo_actor_kernel, in_pad=in_pad)

    out = pl.pallas_call(
        kernel,
        out_shape=jax.ShapeDtypeStruct((B_pad, 2 * LANE), jnp.float32),
        grid=(B_pad // tile_b,),
        in_specs=[
            batch_spec((tile_b, in_pad + LANE)),      # [obs | h] slab
            resident_spec((in_pad + LANE, 4 * LANE)), # fused fc1 / Whh weights
            resident_spec((1, LANE)),                 # b1
            resident_spec((LANE, 3 * LANE)),          # wih packed
            resident_spec((1, 3 * LANE)),             # bi packed
            resident_spec((1, LANE)),                 # bhn
            resident_spec((LANE, LANE)),              # w2t
            resident_spec((1, LANE)),                 # b2
        ],
        out_specs=batch_spec((tile_b, 2 * LANE)),
        compiler_params=pltpu.CompilerParams(
            dimension_semantics=("parallel",)),
    )(slab, wa, b1, wih, bi, bhn, w2t, b2)

    h_new = out[:B, :H]
    q = out[:B, LANE:LANE + n_actions]
    return q, h_new


def _reference_forward(obs, hidden_state, params, H):
    """Pure-JAX reference (mirrors PyTorch Linear / GRUCell / Linear)."""
    x = jnp.maximum(obs @ params["fc1_w"].T + params["fc1_b"], 0.0)
    h_in = hidden_state.reshape(-1, H)
    gi = x @ params["gru_w_ih"].T + params["gru_b_ih"]
    gh = h_in @ params["gru_w_hh"].T + params["gru_b_hh"]
    r = jax.nn.sigmoid(gi[:, :H] + gh[:, :H])
    z = jax.nn.sigmoid(gi[:, H:2 * H] + gh[:, H:2 * H])
    n = jnp.tanh(gi[:, 2 * H:] + r * gh[:, 2 * H:])
    h = (1.0 - z) * n + z * h_in
    q = h @ params["fc2_w"].T + params["fc2_b"]
    return q, h


def init_params(key, input_shape, rnn_hidden_dim, n_actions):
    """Deterministic synthetic init (PyTorch-style uniform ±1/sqrt(fan_in))."""
    H = rnn_hidden_dim
    ks = jax.random.split(key, 8)

    def u(k, shape, fan_in):
        bound = 1.0 / jnp.sqrt(jnp.float32(fan_in))
        return jax.random.uniform(k, shape, jnp.float32, -bound, bound)

    return {
        "fc1_w": u(ks[0], (H, input_shape), input_shape),
        "fc1_b": u(ks[1], (H,), input_shape),
        "gru_w_ih": u(ks[2], (3 * H, H), H),
        "gru_w_hh": u(ks[3], (3 * H, H), H),
        "gru_b_ih": u(ks[4], (3 * H,), H),
        "gru_b_hh": u(ks[5], (3 * H,), H),
        "fc2_w": u(ks[6], (n_actions, H), H),
        "fc2_b": u(ks[7], (n_actions,), H),
    }


if __name__ == "__main__":
    B = 4              # batch (n_agents * n_episodes)
    INPUT_SHAPE = 40   # obs feature dim
    H = 32             # args.rnn_hidden_dim
    N_ACTIONS = 8      # args.n_actions

    key = jax.random.PRNGKey(0)
    k_params, k_obs, k_h = jax.random.split(key, 3)

    params = init_params(k_params, INPUT_SHAPE, H, N_ACTIONS)
    obs = jax.random.normal(k_obs, (B, INPUT_SHAPE), jnp.float32)
    hidden_state = jax.random.normal(k_h, (B, H), jnp.float32)

    q, h = ppo_actor_forward(obs, hidden_state, params, rnn_hidden_dim=H)
    jax.block_until_ready((q, h))

    q_ref, h_ref = _reference_forward(obs, hidden_state, params, H)
    assert q.shape == (B, N_ACTIONS) and h.shape == (B, H)
    assert jnp.allclose(q, q_ref, atol=1e-5, rtol=1e-5)
    assert jnp.allclose(h, h_ref, atol=1e-5, rtol=1e-5)

    print("KERNEL_OK")
</pallas_src>

<mosaic_0001>
module attributes {stable_mosaic.version = 11 : i64} {
  func.func @ppo_actor_kernel(%arg0: i32, %arg1: memref<8x256xf32, #tpu.memory_space<vmem>>, %arg2: memref<256x512xf32, #tpu.memory_space<vmem>>, %arg3: memref<1x128xf32, #tpu.memory_space<vmem>>, %arg4: memref<128x384xf32, #tpu.memory_space<vmem>>, %arg5: memref<1x384xf32, #tpu.memory_space<vmem>>, %arg6: memref<1x128xf32, #tpu.memory_space<vmem>>, %arg7: memref<128x128xf32, #tpu.memory_space<vmem>>, %arg8: memref<1x128xf32, #tpu.memory_space<vmem>>, %arg9: memref<8x256xf32, #tpu.memory_space<vmem>>) attributes {dimension_semantics = [#tpu.dimension_semantics<parallel>], iteration_bounds = array<i64: 1>, scalar_prefetch = 0 : i64, scratch_operands = 0 : i64, tpu.core_type = #tpu.core_type<tc>, window_params = [{transform_indices = @transform_0, window_bounds = array<i64: 8, 256>}, {pipeline_mode = #tpu.pipeline_mode<synchronous>, transform_indices = @transform_1, window_bounds = array<i64: 256, 512>}, {pipeline_mode = #tpu.pipeline_mode<synchronous>, transform_indices = @transform_2, window_bounds = array<i64: 1, 128>}, {pipeline_mode = #tpu.pipeline_mode<synchronous>, transform_indices = @transform_3, window_bounds = array<i64: 128, 384>}, {pipeline_mode = #tpu.pipeline_mode<synchronous>, transform_indices = @transform_4, window_bounds = array<i64: 1, 384>}, {pipeline_mode = #tpu.pipeline_mode<synchronous>, transform_indices = @transform_5, window_bounds = array<i64: 1, 128>}, {pipeline_mode = #tpu.pipeline_mode<synchronous>, transform_indices = @transform_6, window_bounds = array<i64: 128, 128>}, {pipeline_mode = #tpu.pipeline_mode<synchronous>, transform_indices = @transform_7, window_bounds = array<i64: 1, 128>}, {transform_indices = @transform_8, window_bounds = array<i64: 8, 256>}]} {
    %c0 = arith.constant 0 : index
    %c0_0 = arith.constant 0 : index
    %0 = vector.load %arg1[%c0, %c0_0] : memref<8x256xf32, #tpu.memory_space<vmem>>, vector<8x256xf32>
    %1 = vector.extract_strided_slice %0 {offsets = [0, 128], sizes = [8, 128], strides = [1, 1]} : vector<8x256xf32> to vector<8x128xf32>
    %c0_1 = arith.constant 0 : index
    %c0_2 = arith.constant 0 : index
    %2 = vector.load %arg2[%c0_1, %c0_2] : memref<256x512xf32, #tpu.memory_space<vmem>>, vector<256x512xf32>
    %cst = arith.constant dense<0.000000e+00> : vector<8x512xf32>
    %3 = tpu.matmul %0, %2, %cst {dimension_numbers = #tpu.dot_dimension_numbers<[1], [0], [0], [1], [0, 0, 1, 1], [], []>} : vector<8x256xf32>, vector<256x512xf32>, vector<8x512xf32> -> vector<8x512xf32>
    %4 = vector.extract_strided_slice %3 {offsets = [0, 0], sizes = [8, 128], strides = [1, 1]} : vector<8x512xf32> to vector<8x128xf32>
    %c0_3 = arith.constant 0 : index
    %c0_4 = arith.constant 0 : index
    %5 = vector.load %arg3[%c0_3, %c0_4] : memref<1x128xf32, #tpu.memory_space<vmem>>, vector<1x128xf32>
    %6 = vector.broadcast %5 : vector<1x128xf32> to vector<8x128xf32>
    %7 = arith.addf %4, %6 : vector<8x128xf32>
    %cst_5 = arith.constant 0.000000e+00 : f32
    %8 = vector.broadcast %cst_5 : f32 to vector<8x128xf32>
    %9 = arith.maximumf %7, %8 : vector<8x128xf32>
    %10 = vector.extract_strided_slice %3 {offsets = [0, 128], sizes = [8, 384], strides = [1, 1]} : vector<8x512xf32> to vector<8x384xf32>
    %c0_6 = arith.constant 0 : index
    %c0_7 = arith.constant 0 : index
    %11 = vector.load %arg4[%c0_6, %c0_7] : memref<128x384xf32, #tpu.memory_space<vmem>>, vector<128x384xf32>
    %cst_8 = arith.constant dense<0.000000e+00> : vector<8x384xf32>
    %12 = tpu.matmul %9, %11, %cst_8 {dimension_numbers = #tpu.dot_dimension_numbers<[1], [0], [0], [1], [0, 0, 1, 1], [], []>} : vector<8x128xf32>, vector<128x384xf32>, vector<8x384xf32> -> vector<8x384xf32>
    %c0_9 = arith.constant 0 : index
    %c0_10 = arith.constant 0 : index
    %13 = vector.load %arg5[%c0_9, %c0_10] : memref<1x384xf32, #tpu.memory_space<vmem>>, vector<1x384xf32>
    %14 = vector.broadcast %13 : vector<1x384xf32> to vector<8x384xf32>
    %15 = arith.addf %12, %14 : vector<8x384xf32>
    %16 = vector.extract_strided_slice %15 {offsets = [0, 0], sizes = [8, 128], strides = [1, 1]} : vector<8x384xf32> to vector<8x128xf32>
    %17 = vector.extract_strided_slice %10 {offsets = [0, 0], sizes = [8, 128], strides = [1, 1]} : vector<8x384xf32> to vector<8x128xf32>
    %18 = arith.addf %16, %17 : vector<8x128xf32>
    %19 = arith.negf %18 : vector<8x128xf32>
    %20 = math.exp %19 : vector<8x128xf32>
    %cst_11 = arith.constant 1.000000e+00 : f32
    %21 = vector.broadcast %cst_11 : f32 to vector<8x128xf32>
    %22 = arith.addf %21, %20 : vector<8x128xf32>
    %23 = arith.divf %21, %22 : vector<8x128xf32>
    %24 = vector.extract_strided_slice %15 {offsets = [0, 128], sizes = [8, 128], strides = [1, 1]} : vector<8x384xf32> to vector<8x128xf32>
    %25 = vector.extract_strided_slice %10 {offsets = [0, 128], sizes = [8, 128], strides = [1, 1]} : vector<8x384xf32> to vector<8x128xf32>
    %26 = arith.addf %24, %25 : vector<8x128xf32>
    %27 = arith.negf %26 : vector<8x128xf32>
    %28 = math.exp %27 : vector<8x128xf32>
    %cst_12 = arith.constant 1.000000e+00 : f32
    %29 = vector.broadcast %cst_12 : f32 to vector<8x128xf32>
    %30 = arith.addf %29, %28 : vector<8x128xf32>
    %31 = arith.divf %29, %30 : vector<8x128xf32>
    %32 = vector.extract_strided_slice %15 {offsets = [0, 256], sizes = [8, 128], strides = [1, 1]} : vector<8x384xf32> to vector<8x128xf32>
    %33 = vector.extract_strided_slice %10 {offsets = [0, 256], sizes = [8, 128], strides = [1, 1]} : vector<8x384xf32> to vector<8x128xf32>
    %c0_13 = arith.constant 0 : index
    %c0_14 = arith.constant 0 : index
    %34 = vector.load %arg6[%c0_13, %c0_14] : memref<1x128xf32, #tpu.memory_space<vmem>>, vector<1x128xf32>
    %35 = vector.broadcast %34 : vector<1x128xf32> to vector<8x128xf32>
    %36 = arith.addf %33, %35 : vector<8x128xf32>
    %37 = arith.mulf %23, %36 : vector<8x128xf32>
    %38 = arith.addf %32, %37 : vector<8x128xf32>
    %39 = math.tanh %38 : vector<8x128xf32>
    %cst_15 = arith.constant 1.000000e+00 : f32
    %40 = vector.broadcast %cst_15 : f32 to vector<8x128xf32>
    %41 = arith.subf %40, %31 : vector<8x128xf32>
    %42 = arith.mulf %41, %39 : vector<8x128xf32>
    %43 = arith.mulf %31, %1 : vector<8x128xf32>
    %44 = arith.addf %42, %43 : vector<8x128xf32>
    %c0_16 = arith.constant 0 : index
    %c0_17 = arith.constant 0 : index
    %45 = vector.load %arg7[%c0_16, %c0_17] : memref<128x128xf32, #tpu.memory_space<vmem>>, vector<128x128xf32>
    %cst_18 = arith.constant dense<0.000000e+00> : vector<8x128xf32>
    %46 = tpu.matmul %44, %45, %cst_18 {dimension_numbers = #tpu.dot_dimension_numbers<[1], [0], [0], [1], [0, 0, 1, 1], [], []>} : vector<8x128xf32>, vector<128x128xf32>, vector<8x128xf32> -> vector<8x128xf32>
    %c0_19 = arith.constant 0 : index
    %c0_20 = arith.constant 0 : index
    %47 = vector.load %arg8[%c0_19, %c0_20] : memref<1x128xf32, #tpu.memory_space<vmem>>, vector<1x128xf32>
    %48 = vector.broadcast %47 : vector<1x128xf32> to vector<8x128xf32>
    %49 = arith.addf %46, %48 : vector<8x128xf32>
    %c0_21 = arith.constant 0 : index
    %c0_22 = arith.constant 0 : index
    %50 = vector.load %arg9[%c0_21, %c0_22] : memref<8x256xf32, #tpu.memory_space<vmem>>, vector<8x128xf32>
    tpu.vector_store %arg9[%c0_21, %c0_22], %44 {strides = array<i32>} : memref<8x256xf32, #tpu.memory_space<vmem>>, vector<8x128xf32>,
    %c0_23 = arith.constant 0 : index
    %c128 = arith.constant 128 : index
    %51 = vector.load %arg9[%c0_23, %c128] : memref<8x256xf32, #tpu.memory_space<vmem>>, vector<8x128xf32>
    tpu.vector_store %arg9[%c0_23, %c128], %49 {strides = array<i32>} : memref<8x256xf32, #tpu.memory_space<vmem>>, vector<8x128xf32>,
    return
  }
  func.func @transform_0(%arg0: i32) -> (i32, i32) {
    %c0_i32 = arith.constant 0 : i32
    %c0_i32_0 = arith.constant 0 : i32
    return %arg0, %c0_i32 : i32, i32
  }
  func.func @transform_1(%arg0: i32) -> (i32, i32) {
    %c0_i32 = arith.constant 0 : i32
    %c0_i32_0 = arith.constant 0 : i32
    %c0_i32_1 = arith.constant 0 : i32
    return %c0_i32, %c0_i32_0 : i32, i32
  }
  func.func @transform_2(%arg0: i32) -> (i32, i32) {
    %c0_i32 = arith.constant 0 : i32
    %c0_i32_0 = arith.constant 0 : i32
    %c0_i32_1 = arith.constant 0 : i32
    return %c0_i32, %c0_i32_0 : i32, i32
  }
  func.func @transform_3(%arg0: i32) -> (i32, i32) {
    %c0_i32 = arith.constant 0 : i32
    %c0_i32_0 = arith.constant 0 : i32
    %c0_i32_1 = arith.constant 0 : i32
    return %c0_i32, %c0_i32_0 : i32, i32
  }
  func.func @transform_4(%arg0: i32) -> (i32, i32) {
    %c0_i32 = arith.constant 0 : i32
    %c0_i32_0 = arith.constant 0 : i32
    %c0_i32_1 = arith.constant 0 : i32
    return %c0_i32, %c0_i32_0 : i32, i32
  }
  func.func @transform_5(%arg0: i32) -> (i32, i32) {
    %c0_i32 = arith.constant 0 : i32
    %c0_i32_0 = arith.constant 0 : i32
    %c0_i32_1 = arith.constant 0 : i32
    return %c0_i32, %c0_i32_0 : i32, i32
  }
  func.func @transform_6(%arg0: i32) -> (i32, i32) {
    %c0_i32 = arith.constant 0 : i32
    %c0_i32_0 = arith.constant 0 : i32
    %c0_i32_1 = arith.constant 0 : i32
    return %c0_i32, %c0_i32_0 : i32, i32
  }
  func.func @transform_7(%arg0: i32) -> (i32, i32) {
    %c0_i32 = arith.constant 0 : i32
    %c0_i32_0 = arith.constant 0 : i32
    %c0_i32_1 = arith.constant 0 : i32
    return %c0_i32, %c0_i32_0 : i32, i32
  }
  func.func @transform_8(%arg0: i32) -> (i32, i32) {
    %c0_i32 = arith.constant 0 : i32
    %c0_i32_0 = arith.constant 0 : i32
    return %arg0, %c0_i32 : i32, i32
  }
}

</mosaic_0001>

<llo_original>
// kernel: ppo_actor_forward.1
$region0: #{ppo_actor_forward.1}
  #allocation0 [shape = 'u32[]', space=smem, size = 0x4, offset = 0x4, fixed_abs, tag = 'smem constant byte address 0x4 - core index']
  #allocation1 [shape = 'u32[144,128]{1,0:T(1,128)}', space=vmem, size = 0x12000, scoped, tag = 'internal scratch']
  %s0 = inlined_call_operand.vmem [shape: f32[8,256], index: 0, kind: input, shape index: {}]
  %s1 = inlined_call_operand.vmem [shape: f32[256,512], index: 1, kind: input, shape index: {}]
  %s2 = inlined_call_operand.vmem [shape: f32[1,128], index: 2, kind: input, shape index: {}]
  %s3 = inlined_call_operand.vmem [shape: f32[128,384], index: 3, kind: input, shape index: {}]
  %s4 = inlined_call_operand.vmem [shape: f32[1,384], index: 4, kind: input, shape index: {}]
  %s5 = inlined_call_operand.vmem [shape: f32[1,128], index: 5, kind: input, shape index: {}]
  %s6 = inlined_call_operand.vmem [shape: f32[128,128], index: 6, kind: input, shape index: {}]
  %s7 = inlined_call_operand.vmem [shape: f32[1,128], index: 7, kind: input, shape index: {}]
  %s8 = inlined_call_operand.vmem [shape: f32[8,256], index: 8, kind: output, shape index: {}]
  %s9 = sld [smem:[#allocation0]]
  $region42: #{ppo_actor_forward.1} parent=0
    _
  %s11 = ssub.s32 1, %s9
  %s12 = scalar_select 0, %s11, %s9
  // Predicated region
  $region2: #{ppo_actor_forward.1} parent=0 // pred_check
    _
  $region3: #{ppo_actor_forward.1} parent=0 // pred_check_branch
    %14 = sbr.rel (0) target = $region5
  $region4: #{ppo_actor_forward.1} parent=0 // pred_region
    _
  $region5: #{ppo_actor_forward.1} parent=0 // pred_fallthru
    _
  // Predicated region
  $region6: #{ppo_actor_forward.1} parent=0 // pred_check
    _
  $region7: #{ppo_actor_forward.1} parent=0 // pred_check_branch
    %16 = sbr.rel (0) target = $region9
  $region8: #{ppo_actor_forward.1} parent=0 // pred_region
    _
  $region9: #{ppo_actor_forward.1} parent=0 // pred_fallthru
    _
  // Predicated region
  $region10: #{ppo_actor_forward.1} parent=0 // pred_check
    _
  $region11: #{ppo_actor_forward.1} parent=0 // pred_check_branch
    %18 = sbr.rel (0) target = $region13
  $region12: #{ppo_actor_forward.1} parent=0 // pred_region
    _
  $region13: #{ppo_actor_forward.1} parent=0 // pred_fallthru
    _
  // Predicated region
  $region14: #{ppo_actor_forward.1} parent=0 // pred_check
    _
  $region15: #{ppo_actor_forward.1} parent=0 // pred_check_branch
    %20 = sbr.rel (0) target = $region17
  $region16: #{ppo_actor_forward.1} parent=0 // pred_region
    _
  $region17: #{ppo_actor_forward.1} parent=0 // pred_fallthru
    _
  // Predicated region
  $region18: #{ppo_actor_forward.1} parent=0 // pred_check
    _
  $region19: #{ppo_actor_forward.1} parent=0 // pred_check_branch
    %22 = sbr.rel (0) target = $region21
  $region20: #{ppo_actor_forward.1} parent=0 // pred_region
    _
  $region21: #{ppo_actor_forward.1} parent=0 // pred_fallthru
    _
  // Predicated region
  $region22: #{ppo_actor_forward.1} parent=0 // pred_check
    _
  $region23: #{ppo_actor_forward.1} parent=0 // pred_check_branch
    %24 = sbr.rel (0) target = $region25
  $region24: #{ppo_actor_forward.1} parent=0 // pred_region
    _
  $region25: #{ppo_actor_forward.1} parent=0 // pred_fallthru
    _
  // Predicated region
  $region26: #{ppo_actor_forward.1} parent=0 // pred_check
    _
  $region27: #{ppo_actor_forward.1} parent=0 // pred_check_branch
    %26 = sbr.rel (0) target = $region29
  $region28: #{ppo_actor_forward.1} parent=0 // pred_region
    _
  $region29: #{ppo_actor_forward.1} parent=0 // pred_fallthru
    _
  // Predicated region
  $region30: #{ppo_actor_forward.1} parent=0 // pred_check
    _
  $region31: #{ppo_actor_forward.1} parent=0 // pred_check_branch
    %28 = sbr.rel (0) target = $region33
  $region32: #{ppo_actor_forward.1} parent=0 // pred_region
    _
  $region33: #{ppo_actor_forward.1} parent=0 // pred_fallthru
    _
  %v29 = vld [vmem:[%s0] sm:$0xff]
  %v30 = vld [vmem:[%s0 + $0x8] sm:$0xff]
  %v31 = vld [vmem:[%s1] sm:$0xff]
  %v32 = vld [vmem:[%s1 + $0x8] sm:$0xff]
  %v33 = vld [vmem:[%s1 + $0x10] sm:$0xff]
  %v34 = vld [vmem:[%s1 + $0x18] sm:$0xff]
  %v35 = vld [vmem:[%s1 + $0x20] sm:$0xff]
  %v36 = vld [vmem:[%s1 + $0x28] sm:$0xff]
  %v37 = vld [vmem:[%s1 + $0x30] sm:$0xff]
  %v38 = vld [vmem:[%s1 + $0x38] sm:$0xff]
  %v39 = vld [vmem:[%s1 + $0x40] sm:$0xff]
  %v40 = vld [vmem:[%s1 + $0x48] sm:$0xff]
  %v41 = vld [vmem:[%s1 + $0x50] sm:$0xff]
  %v42 = vld [vmem:[%s1 + $0x58] sm:$0xff]
  %v43 = vld [vmem:[%s1 + $0x60] sm:$0xff]
  %v44 = vld [vmem:[%s1 + $0x68] sm:$0xff]
  %v45 = vld [vmem:[%s1 + $0x70] sm:$0xff]
  %v46 = vld [vmem:[%s1 + $0x78] sm:$0xff]
  %v47 = vld [vmem:[%s1 + $0x80] sm:$0xff]
  %v48 = vld [vmem:[%s1 + $0x88] sm:$0xff]
  %v49 = vld [vmem:[%s1 + $0x90] sm:$0xff]
  %v50 = vld [vmem:[%s1 + $0x98] sm:$0xff]
  %v51 = vld [vmem:[%s1 + $0xa0] sm:$0xff]
  %v52 = vld [vmem:[%s1 + $0xa8] sm:$0xff]
  %v53 = vld [vmem:[%s1 + $0xb0] sm:$0xff]
  %v54 = vld [vmem:[%s1 + $0xb8] sm:$0xff]
  %v55 = vld [vmem:[%s1 + $0xc0] sm:$0xff]
  %v56 = vld [vmem:[%s1 + $0xc8] sm:$0xff]
  %v57 = vld [vmem:[%s1 + $0xd0] sm:$0xff]
  %v58 = vld [vmem:[%s1 + $0xd8] sm:$0xff]
  %v59 = vld [vmem:[%s1 + $0xe0] sm:$0xff]
  %v60 = vld [vmem:[%s1 + $0xe8] sm:$0xff]
  %v61 = vld [vmem:[%s1 + $0xf0] sm:$0xff]
  %v62 = vld [vmem:[%s1 + $0xf8] sm:$0xff]
  %v63 = vld [vmem:[%s1 + $0x100] sm:$0xff]
  %v64 = vld [vmem:[%s1 + $0x108] sm:$0xff]
  %v65 = vld [vmem:[%s1 + $0x110] sm:$0xff]
  %v66 = vld [vmem:[%s1 + $0x118] sm:$0xff]
  %v67 = vld [vmem:[%s1 + $0x120] sm:$0xff]
  %v68 = vld [vmem:[%s1 + $0x128] sm:$0xff]
  %v69 = vld [vmem:[%s1 + $0x130] sm:$0xff]
  %v70 = vld [vmem:[%s1 + $0x138] sm:$0xff]
  %v71 = vld [vmem:[%s1 + $0x140] sm:$0xff]
  %v72 = vld [vmem:[%s1 + $0x148] sm:$0xff]
  %v73 = vld [vmem:[%s1 + $0x150] sm:$0xff]
  %v74 = vld [vmem:[%s1 + $0x158] sm:$0xff]
  %v75 = vld [vmem:[%s1 + $0x160] sm:$0xff]
  %v76 = vld [vmem:[%s1 + $0x168] sm:$0xff]
  %v77 = vld [vmem:[%s1 + $0x170] sm:$0xff]
  %v78 = vld [vmem:[%s1 + $0x178] sm:$0xff]
  %v79 = vld [vmem:[%s1 + $0x180] sm:$0xff]
  %v80 = vld [vmem:[%s1 + $0x188] sm:$0xff]
  %v81 = vld [vmem:[%s1 + $0x190] sm:$0xff]
  %v82 = vld [vmem:[%s1 + $0x198] sm:$0xff]
  %v83 = vld [vmem:[%s1 + $0x1a0] sm:$0xff]
  %v84 = vld [vmem:[%s1 + $0x1a8] sm:$0xff]
  %v85 = vld [vmem:[%s1 + $0x1b0] sm:$0xff]
  %v86 = vld [vmem:[%s1 + $0x1b8] sm:$0xff]
  %v87 = vld [vmem:[%s1 + $0x1c0] sm:$0xff]
  %v88 = vld [vmem:[%s1 + $0x1c8] sm:$0xff]
  %v89 = vld [vmem:[%s1 + $0x1d0] sm:$0xff]
  %v90 = vld [vmem:[%s1 + $0x1d8] sm:$0xff]
  %v91 = vld [vmem:[%s1 + $0x1e0] sm:$0xff]
  %v92 = vld [vmem:[%s1 + $0x1e8] sm:$0xff]
  %v93 = vld [vmem:[%s1 + $0x1f0] sm:$0xff]
  %v94 = vld [vmem:[%s1 + $0x1f8] sm:$0xff]
  %v95 = vld [vmem:[%s1 + $0x200] sm:$0xff]
  %v96 = vld [vmem:[%s1 + $0x208] sm:$0xff]
  %v97 = vld [vmem:[%s1 + $0x210] sm:$0xff]
  %v98 = vld [vmem:[%s1 + $0x218] sm:$0xff]
  %v99 = vld [vmem:[%s1 + $0x220] sm:$0xff]
  %v100 = vld [vmem:[%s1 + $0x228] sm:$0xff]
  %v101 = vld [vmem:[%s1 + $0x230] sm:$0xff]
  %v102 = vld [vmem:[%s1 + $0x238] sm:$0xff]
  %v103 = vld [vmem:[%s1 + $0x240] sm:$0xff]
  %v104 = vld [vmem:[%s1 + $0x248] sm:$0xff]
  %v105 = vld [vmem:[%s1 + $0x250] sm:$0xff]
  %v106 = vld [vmem:[%s1 + $0x258] sm:$0xff]
  %v107 = vld [vmem:[%s1 + $0x260] sm:$0xff]
  %v108 = vld [vmem:[%s1 + $0x268] sm:$0xff]
  %v109 = vld [vmem:[%s1 + $0x270] sm:$0xff]
  %v110 = vld [vmem:[%s1 + $0x278] sm:$0xff]
  %v111 = vld [vmem:[%s1 + $0x280] sm:$0xff]
  %v112 = vld [vmem:[%s1 + $0x288] sm:$0xff]
  %v113 = vld [vmem:[%s1 + $0x290] sm:$0xff]
  %v114 = vld [vmem:[%s1 + $0x298] sm:$0xff]
  %v115 = vld [vmem:[%s1 + $0x2a0] sm:$0xff]
  %v116 = vld [vmem:[%s1 + $0x2a8] sm:$0xff]
  %v117 = vld [vmem:[%s1 + $0x2b0] sm:$0xff]
  %v118 = vld [vmem:[%s1 + $0x2b8] sm:$0xff]
  %v119 = vld [vmem:[%s1 + $0x2c0] sm:$0xff]
  %v120 = vld [vmem:[%s1 + $0x2c8] sm:$0xff]
  %v121 = vld [vmem:[%s1 + $0x2d0] sm:$0xff]
  %v122 = vld [vmem:[%s1 + $0x2d8] sm:$0xff]
  %v123 = vld [vmem:[%s1 + $0x2e0] sm:$0xff]
  %v124 = vld [vmem:[%s1 + $0x2e8] sm:$0xff]
  %v125 = vld [vmem:[%s1 + $0x2f0] sm:$0xff]
  %v126 = vld [vmem:[%s1 + $0x2f8] sm:$0xff]
  %v127 = vld [vmem:[%s1 + $0x300] sm:$0xff]
  %v128 = vld [vmem:[%s1 + $0x308] sm:$0xff]
  %v129 = vld [vmem:[%s1 + $0x310] sm:$0xff]
  %v130 = vld [vmem:[%s1 + $0x318] sm:$0xff]
  %v131 = vld [vmem:[%s1 + $0x320] sm:$0xff]
  %v132 = vld [vmem:[%s1 + $0x328] sm:$0xff]
  %v133 = vld [vmem:[%s1 + $0x330] sm:$0xff]
  %v134 = vld [vmem:[%s1 + $0x338] sm:$0xff]
  %v135 = vld [vmem:[%s1 + $0x340] sm:$0xff]
  %v136 = vld [vmem:[%s1 + $0x348] sm:$0xff]
  %v137 = vld [vmem:[%s1 + $0x350] sm:$0xff]
  %v138 = vld [vmem:[%s1 + $0x358] sm:$0xff]
  %v139 = vld [vmem:[%s1 + $0x360] sm:$0xff]
  %v140 = vld [vmem:[%s1 + $0x368] sm:$0xff]
  %v141 = vld [vmem:[%s1 + $0x370] sm:$0xff]
  %v142 = vld [vmem:[%s1 + $0x378] sm:$0xff]
  %v143 = vld [vmem:[%s1 + $0x380] sm:$0xff]
  %v144 = vld [vmem:[%s1 + $0x388] sm:$0xff]
  %v145 = vld [vmem:[%s1 + $0x390] sm:$0xff]
  %v146 = vld [vmem:[%s1 + $0x398] sm:$0xff]
  %v147 = vld [vmem:[%s1 + $0x3a0] sm:$0xff]
  %v148 = vld [vmem:[%s1 + $0x3a8] sm:$0xff]
  %v149 = vld [vmem:[%s1 + $0x3b0] sm:$0xff]
  %v150 = vld [vmem:[%s1 + $0x3b8] sm:$0xff]
  %v151 = vld [vmem:[%s1 + $0x3c0] sm:$0xff]
  %v152 = vld [vmem:[%s1 + $0x3c8] sm:$0xff]
  %v153 = vld [vmem:[%s1 + $0x3d0] sm:$0xff]
  %v154 = vld [vmem:[%s1 + $0x3d8] sm:$0xff]
  %v155 = vld [vmem:[%s1 + $0x3e0] sm:$0xff]
  %v156 = vld [vmem:[%s1 + $0x3e8] sm:$0xff]
  %v157 = vld [vmem:[%s1 + $0x3f0] sm:$0xff]
  %v158 = vld [vmem:[%s1 + $0x3f8] sm:$0xff]
  %159 = vmatprep.subr.mxu0 %v32
  %160 = vmatpush1.msra.mxu0 %v31
  %161 = vmatprep.subr.mxu0 %v36
  %162 = vmatpush1.msra.mxu0 %v35
  %163 = vmatprep.subr.mxu0 %v40
  %164 = vmatpush1.msra.mxu0 %v39
  %165 = vmatprep.subr.mxu0 %v44
  %166 = vmatpush1.msra.mxu0 %v43
  %167 = vmatprep.subr.mxu0 %v48
  %168 = vmatpush1.msra.mxu0 %v47
  %169 = vmatprep.subr.mxu0 %v52
  %170 = vmatpush1.msra.mxu0 %v51
  %171 = vmatprep.subr.mxu0 %v56
  %172 = vmatpush1.msra.mxu0 %v55
  %173 = vmatprep.subr.mxu0 %v60
  %174 = vmatpush1.msra.mxu0 %v59
  %175 = vmatprep.subr.mxu0 %v64
  %176 = vmatpush1.msra.mxu0 %v63
  %177 = vmatprep.subr.mxu0 %v68
  %178 = vmatpush1.msra.mxu0 %v67
  %179 = vmatprep.subr.mxu0 %v72
  %180 = vmatpush1.msra.mxu0 %v71
  %181 = vmatprep.subr.mxu0 %v76
  %182 = vmatpush1.msra.mxu0 %v75
  %183 = vmatprep.subr.mxu0 %v80
  %184 = vmatpush1.msra.mxu0 %v79
  %185 = vmatprep.subr.mxu0 %v84
  %186 = vmatpush1.msra.mxu0 %v83
  %187 = vmatprep.subr.mxu0 %v88
  %188 = vmatpush1.msra.mxu0 %v87
  %189 = vmatprep.subr.mxu0 %v92
  %190 = vmatpush1.msra.mxu0 %v91
  %191 = vmatprep.subr.mxu0 %v96
  %192 = vmatpush1.msra.mxu0 %v95
  %193 = vmatprep.subr.mxu0 %v100
  %194 = vmatpush1.msra.mxu0 %v99
  %195 = vmatprep.subr.mxu0 %v104
  %196 = vmatpush1.msra.mxu0 %v103
  %197 = vmatprep.subr.mxu0 %v108
  %198 = vmatpush1.msra.mxu0 %v107
  %199 = vmatprep.subr.mxu0 %v112
  %200 = vmatpush1.msra.mxu0 %v111
  %201 = vmatprep.subr.mxu0 %v116
  %202 = vmatpush1.msra.mxu0 %v115
  %203 = vmatprep.subr.mxu0 %v120
  %204 = vmatpush1.msra.mxu0 %v119
  %205 = vmatprep.subr.mxu0 %v124
  %206 = vmatpush1.msra.mxu0 %v123
  %207 = vmatprep.subr.mxu0 %v128
  %208 = vmatpush1.msra.mxu0 %v127
  %209 = vmatprep.subr.mxu0 %v132
  %210 = vmatpush1.msra.mxu0 %v131
  %211 = vmatprep.subr.mxu0 %v136
  %212 = vmatpush1.msra.mxu0 %v135
  %213 = vmatprep.subr.mxu0 %v140
  %214 = vmatpush1.msra.mxu0 %v139
  %215 = vmatprep.subr.mxu0 %v144
  %216 = vmatpush1.msra.mxu0 %v143
  %217 = vmatprep.subr.mxu0 %v148
  %218 = vmatpush1.msra.mxu0 %v147
  %219 = vmatprep.subr.mxu0 %v152
  %220 = vmatpush1.msra.mxu0 %v151
  %221 = vmatprep.subr.mxu0 %v156
  %222 = vmatpush1.msra.mxu0 %v155
  %223 = vmatprep.mubr.f32.mxu0 %v30
  %224 = vmatmul.mubr.f32.gmra.mrb[0].mxu0 %v29
  %v225 = vpop.f32.mrb[0].mxu0
  %v226 = vadd.f32 0.0, %v225
  %v227 = vpop.f32.mrb[0].mxu0
  %v228 = vadd.f32 0.0, %v227
  %229 = vdwg.mxu0
  %230 = vmatprep.subr.mxu0 %v34
  %231 = vmatpush1.msra.mxu0 %v33
  %232 = vmatprep.subr.mxu0 %v38
  %233 = vmatpush1.msra.mxu0 %v37
  %234 = vmatprep.subr.mxu0 %v42
  %235 = vmatpush1.msra.mxu0 %v41
  %236 = vmatprep.subr.mxu0 %v46
  %237 = vmatpush1.msra.mxu0 %v45
  %238 = vmatprep.subr.mxu0 %v50
  %239 = vmatpush1.msra.mxu0 %v49
  %240 = vmatprep.subr.mxu0 %v54
  %241 = vmatpush1.msra.mxu0 %v53
  %242 = vmatprep.subr.mxu0 %v58
  %243 = vmatpush1.msra.mxu0 %v57
  %244 = vmatprep.subr.mxu0 %v62
  %245 = vmatpush1.msra.mxu0 %v61
  %246 = vmatprep.subr.mxu0 %v66
  %247 = vmatpush1.msra.mxu0 %v65
  %248 = vmatprep.subr.mxu0 %v70
  %249 = vmatpush1.msra.mxu0 %v69
  %250 = vmatprep.subr.mxu0 %v74
  %251 = vmatpush1.msra.mxu0 %v73
  %252 = vmatprep.subr.mxu0 %v78
  %253 = vmatpush1.msra.mxu0 %v77
  %254 = vmatprep.subr.mxu0 %v82
  %255 = vmatpush1.msra.mxu0 %v81
  %256 = vmatprep.subr.mxu0 %v86
  %257 = vmatpush1.msra.mxu0 %v85
  %258 = vmatprep.subr.mxu0 %v90
  %259 = vmatpush1.msra.mxu0 %v89
  %260 = vmatprep.subr.mxu0 %v94
  %261 = vmatpush1.msra.mxu0 %v93
  %262 = vmatprep.subr.mxu0 %v98
  %263 = vmatpush1.msra.mxu0 %v97
  %264 = vmatprep.subr.mxu0 %v102
  %265 = vmatpush1.msra.mxu0 %v101
  %266 = vmatprep.subr.mxu0 %v106
  %267 = vmatpush1.msra.mxu0 %v105
  %268 = vmatprep.subr.mxu0 %v110
  %269 = vmatpush1.msra.mxu0 %v109
  %270 = vmatprep.subr.mxu0 %v114
  %271 = vmatpush1.msra.mxu0 %v113
  %272 = vmatprep.subr.mxu0 %v118
  %273 = vmatpush1.msra.mxu0 %v117
  %274 = vmatprep.subr.mxu0 %v122
  %275 = vmatpush1.msra.mxu0 %v121
  %276 = vmatprep.subr.mxu0 %v126
  %277 = vmatpush1.msra.mxu0 %v125
  %278 = vmatprep.subr.mxu0 %v130
  %279 = vmatpush1.msra.mxu0 %v129
  %280 = vmatprep.subr.mxu0 %v134
  %281 = vmatpush1.msra.mxu0 %v133
  %282 = vmatprep.subr.mxu0 %v138
  %283 = vmatpush1.msra.mxu0 %v137
  %284 = vmatprep.subr.mxu0 %v142
  %285 = vmatpush1.msra.mxu0 %v141
  %286 = vmatprep.subr.mxu0 %v146
  %287 = vmatpush1.msra.mxu0 %v145
  %288 = vmatprep.subr.mxu0 %v150
  %289 = vmatpush1.msra.mxu0 %v149
  %290 = vmatprep.subr.mxu0 %v154
  %291 = vmatpush1.msra.mxu0 %v153
  %292 = vmatprep.subr.mxu0 %v158
  %293 = vmatpush1.msra.mxu0 %v157
  %294 = vmatprep.mubr.f32.mxu0 %v30
  %295 = vmatmul.mubr.f32.gmra.mrb[0].mxu0 %v29
  %v296 = vpop.f32.mrb[0].mxu0
  %v297 = vadd.f32 0.0, %v296
  %v298 = vpop.f32.mrb[0].mxu0
  %v299 = vadd.f32 0.0, %v298
  %300 = vdwg.mxu0
  %v301 = vld [vmem:[%s2] sm:$0x1]
  %v303 = vlaneseq
  %v304 = vshrl.u32 %v303, 7
  %v305 = vsub.s32 0, %v304
  %v306 = vrot.slane %v301, %v305
  %v308 = vadd.f32 %v226, %v306
  %v309 = vmax.f32 %v308, 0.0
  %v310 = vld [vmem:[%s3] sm:$0xff]
  %v311 = vld [vmem:[%s3 + $0x8] sm:$0xff]
  %v312 = vld [vmem:[%s3 + $0x10] sm:$0xff]
  %v313 = vld [vmem:[%s3 + $0x18] sm:$0xff]
  %v314 = vld [vmem:[%s3 + $0x20] sm:$0xff]
  %v315 = vld [vmem:[%s3 + $0x28] sm:$0xff]
  %v316 = vld [vmem:[%s3 + $0x30] sm:$0xff]
  %v317 = vld [vmem:[%s3 + $0x38] sm:$0xff]
  %v318 = vld [vmem:[%s3 + $0x40] sm:$0xff]
  %v319 = vld [vmem:[%s3 + $0x48] sm:$0xff]
  %v320 = vld [vmem:[%s3 + $0x50] sm:$0xff]
  %v321 = vld [vmem:[%s3 + $0x58] sm:$0xff]
  %v322 = vld [vmem:[%s3 + $0x60] sm:$0xff]
  %v323 = vld [vmem:[%s3 + $0x68] sm:$0xff]
  %v324 = vld [vmem:[%s3 + $0x70] sm:$0xff]
  %v325 = vld [vmem:[%s3 + $0x78] sm:$0xff]
  %v326 = vld [vmem:[%s3 + $0x80] sm:$0xff]
  %v327 = vld [vmem:[%s3 + $0x88] sm:$0xff]
  %v328 = vld [vmem:[%s3 + $0x90] sm:$0xff]
  %v329 = vld [vmem:[%s3 + $0x98] sm:$0xff]
  %v330 = vld [vmem:[%s3 + $0xa0] sm:$0xff]
  %v331 = vld [vmem:[%s3 + $0xa8] sm:$0xff]
  %v332 = vld [vmem:[%s3 + $0xb0] sm:$0xff]
  %v333 = vld [vmem:[%s3 + $0xb8] sm:$0xff]
  %v334 = vld [vmem:[%s3 + $0xc0] sm:$0xff]
  %v335 = vld [vmem:[%s3 + $0xc8] sm:$0xff]
  %v336 = vld [vmem:[%s3 + $0xd0] sm:$0xff]
  %v337 = vld [vmem:[%s3 + $0xd8] sm:$0xff]
  %v338 = vld [vmem:[%s3 + $0xe0] sm:$0xff]
  %v339 = vld [vmem:[%s3 + $0xe8] sm:$0xff]
  %v340 = vld [vmem:[%s3 + $0xf0] sm:$0xff]
  %v341 = vld [vmem:[%s3 + $0xf8] sm:$0xff]
  %v342 = vld [vmem:[%s3 + $0x100] sm:$0xff]
  %v343 = vld [vmem:[%s3 + $0x108] sm:$0xff]
  %v344 = vld [vmem:[%s3 + $0x110] sm:$0xff]
  %v345 = vld [vmem:[%s3 + $0x118] sm:$0xff]
  %v346 = vld [vmem:[%s3 + $0x120] sm:$0xff]
  %v347 = vld [vmem:[%s3 + $0x128] sm:$0xff]
  %v348 = vld [vmem:[%s3 + $0x130] sm:$0xff]
  %v349 = vld [vmem:[%s3 + $0x138] sm:$0xff]
  %v350 = vld [vmem:[%s3 + $0x140] sm:$0xff]
  %v351 = vld [vmem:[%s3 + $0x148] sm:$0xff]
  %v352 = vld [vmem:[%s3 + $0x150] sm:$0xff]
  %v353 = vld [vmem:[%s3 + $0x158] sm:$0xff]
  %v354 = vld [vmem:[%s3 + $0x160] sm:$0xff]
  %v355 = vld [vmem:[%s3 + $0x168] sm:$0xff]
  %v356 = vld [vmem:[%s3 + $0x170] sm:$0xff]
  %v357 = vld [vmem:[%s3 + $0x178] sm:$0xff]
  %v358 = vld [vmem:[%s4] sm:$0x7]
  %v360 = vlaneseq
  %v361 = vshrl.u32 %v360, 7
  %v362 = vsub.s32 0, %v361
  %v363 = vrot.slane %v358, %v362
  %v364 = vlaneseq
  %v365 = vshrl.u32 %v364, 7
  %v366 = vsub.s32 1, %v365
  %v367 = vrot.slane %v358, %v366
  %v368 = vlaneseq
  %v369 = vshrl.u32 %v368, 7
  %v370 = vsub.s32 2, %v369
  %v371 = vrot.slane %v358, %v370
  %375 = vmatprep.subr.mxu0 %v311
  %376 = vmatpush1.msra.mxu0 %v310
  %377 = vmatprep.subr.mxu0 %v314
  %378 = vmatpush1.msra.mxu0 %v313
  %379 = vmatprep.subr.mxu0 %v317
  %380 = vmatpush1.msra.mxu0 %v316
  %381 = vmatprep.subr.mxu0 %v320
  %382 = vmatpush1.msra.mxu0 %v319
  %383 = vmatprep.subr.mxu0 %v323
  %384 = vmatpush1.msra.mxu0 %v322
  %385 = vmatprep.subr.mxu0 %v326
  %386 = vmatpush1.msra.mxu0 %v325
  %387 = vmatprep.subr.mxu0 %v329
  %388 = vmatpush1.msra.mxu0 %v328
  %389 = vmatprep.subr.mxu0 %v332
  %390 = vmatpush1.msra.mxu0 %v331
  %391 = vmatprep.subr.mxu0 %v335
  %392 = vmatpush1.msra.mxu0 %v334
  %393 = vmatprep.subr.mxu0 %v338
  %394 = vmatpush1.msra.mxu0 %v337
  %395 = vmatprep.subr.mxu0 %v341
  %396 = vmatpush1.msra.mxu0 %v340
  %397 = vmatprep.subr.mxu0 %v344
  %398 = vmatpush1.msra.mxu0 %v343
  %399 = vmatprep.subr.mxu0 %v347
  %400 = vmatpush1.msra.mxu0 %v346
  %401 = vmatprep.subr.mxu0 %v350
  %402 = vmatpush1.msra.mxu0 %v349
  %403 = vmatprep.subr.mxu0 %v353
  %404 = vmatpush1.msra.mxu0 %v352
  %405 = vmatprep.subr.mxu0 %v356
  %406 = vmatpush1.msra.mxu0 %v355
  %407 = vmatprep.subr.mxu0 0.0
  %408 = vmatpush1.msra.mxu0 0.0
  %409 = vmatprep.subr.mxu0 0.0
  %410 = vmatpush1.msra.mxu0 0.0
  %411 = vmatprep.subr.mxu0 0.0
  %412 = vmatpush1.msra.mxu0 0.0
  %413 = vmatprep.subr.mxu0 0.0
  %414 = vmatpush1.msra.mxu0 0.0
  %415 = vmatprep.subr.mxu0 0.0
  %416 = vmatpush1.msra.mxu0 0.0
  %417 = vmatprep.subr.mxu0 0.0
  %418 = vmatpush1.msra.mxu0 0.0
  %419 = vmatprep.subr.mxu0 0.0
  %420 = vmatpush1.msra.mxu0 0.0
  %421 = vmatprep.subr.mxu0 0.0
  %422 = vmatpush1.msra.mxu0 0.0
  %423 = vmatprep.subr.mxu0 0.0
  %424 = vmatpush1.msra.mxu0 0.0
  %425 = vmatprep.subr.mxu0 0.0
  %426 = vmatpush1.msra.mxu0 0.0
  %427 = vmatprep.subr.mxu0 0.0
  %428 = vmatpush1.msra.mxu0 0.0
  %429 = vmatprep.subr.mxu0 0.0
  %430 = vmatpush1.msra.mxu0 0.0
  %431 = vmatprep.subr.mxu0 0.0
  %432 = vmatpush1.msra.mxu0 0.0
  %433 = vmatprep.subr.mxu0 0.0
  %434 = vmatpush1.msra.mxu0 0.0
  %435 = vmatprep.subr.mxu0 0.0
  %436 = vmatpush1.msra.mxu0 0.0
  %437 = vmatprep.subr.mxu0 0.0
  %438 = vmatpush1.msra.mxu0 0.0
  %439 = vmatprep.mubr.f32.mxu0 0.0
  %440 = vmatmul.mubr.f32.gmra.mrb[0].mxu0 %v309
  %v441 = vpop.f32.mrb[0].mxu0
  %v442 = vadd.f32 %v363, %v441
  %v443 = vpop.f32.mrb[0].mxu0
  %v444 = vadd.f32 %v367, %v443
  %445 = vdwg.mxu0
  %446 = vmatprep.subr.mxu0 0.0
  %447 = vmatpush1.msra.mxu0 %v312
  %448 = vmatprep.subr.mxu0 0.0
  %449 = vmatpush1.msra.mxu0 %v315
  %450 = vmatprep.subr.mxu0 0.0
  %451 = vmatpush1.msra.mxu0 %v318
  %452 = vmatprep.subr.mxu0 0.0
  %453 = vmatpush1.msra.mxu0 %v321
  %454 = vmatprep.subr.mxu0 0.0
  %455 = vmatpush1.msra.mxu0 %v324
  %456 = vmatprep.subr.mxu0 0.0
  %457 = vmatpush1.msra.mxu0 %v327
  %458 = vmatprep.subr.mxu0 0.0
  %459 = vmatpush1.msra.mxu0 %v330
  %460 = vmatprep.subr.mxu0 0.0
  %461 = vmatpush1.msra.mxu0 %v333
  %462 = vmatprep.subr.mxu0 0.0
  %463 = vmatpush1.msra.mxu0 %v336
  %464 = vmatprep.subr.mxu0 0.0
  %465 = vmatpush1.msra.mxu0 %v339
  %466 = vmatprep.subr.mxu0 0.0
  %467 = vmatpush1.msra.mxu0 %v342
  %468 = vmatprep.subr.mxu0 0.0
  %469 = vmatpush1.msra.mxu0 %v345
  %470 = vmatprep.subr.mxu0 0.0
  %471 = vmatpush1.msra.mxu0 %v348
  %472 = vmatprep.subr.mxu0 0.0
  %473 = vmatpush1.msra.mxu0 %v351
  %474 = vmatprep.subr.mxu0 0.0
  %475 = vmatpush1.msra.mxu0 %v354
  %476 = vmatprep.subr.mxu0 0.0
  %477 = vmatpush1.msra.mxu0 %v357
  %478 = vmatprep.subr.mxu0 0.0
  %479 = vmatpush1.msra.mxu0 0.0
  %480 = vmatprep.subr.mxu0 0.0
  %481 = vmatpush1.msra.mxu0 0.0
  %482 = vmatprep.subr.mxu0 0.0
  %483 = vmatpush1.msra.mxu0 0.0
  %484 = vmatprep.subr.mxu0 0.0
  %485 = vmatpush1.msra.mxu0 0.0
  %486 = vmatprep.subr.mxu0 0.0
  %487 = vmatpush1.msra.mxu0 0.0
  %488 = vmatprep.subr.mxu0 0.0
  %489 = vmatpush1.msra.mxu0 0.0
  %490 = vmatprep.subr.mxu0 0.0
  %491 = vmatpush1.msra.mxu0 0.0
  %492 = vmatprep.subr.mxu0 0.0
  %493 = vmatpush1.msra.mxu0 0.0
  %494 = vmatprep.subr.mxu0 0.0
  %495 = vmatpush1.msra.mxu0 0.0
  %496 = vmatprep.subr.mxu0 0.0
  %497 = vmatpush1.msra.mxu0 0.0
  %498 = vmatprep.subr.mxu0 0.0
  %499 = vmatpush1.msra.mxu0 0.0
  %500 = vmatprep.subr.mxu0 0.0
  %501 = vmatpush1.msra.mxu0 0.0
  %502 = vmatprep.subr.mxu0 0.0
  %503 = vmatpush1.msra.mxu0 0.0
  %504 = vmatprep.subr.mxu0 0.0
  %505 = vmatpush1.msra.mxu0 0.0
  %506 = vmatprep.subr.mxu0 0.0
  %507 = vmatpush1.msra.mxu0 0.0
  %508 = vmatprep.subr.mxu0 0.0
  %509 = vmatpush1.msra.mxu0 0.0
  %510 = vmatprep.mubr.f32.mxu0 0.0
  %511 = vmatmul.mubr.f32.gmra.mrb[0].mxu0 %v309
  %v512 = vpop.f32.mrb[0].mxu0
  %v513 = vadd.f32 %v371, %v512
  %v514 = vpop.f32.mrb[0].mxu0
  %515 = vdwg.mxu0
  %v516 = vadd.f32 %v442, %v228
  %v517 = vxor.u32 %v516, 2147483648
  %v518 = vmul.f32 %v517, 1.442695
  %v519 = vpow.pop %v518
  %v520 = vadd.f32 %v519, 1.0
  %v521 = vrcp.pop %v520
  %v522 = vmul.f32 1.0, %v521
  %v523 = vadd.f32 %v444, %v297
  %v524 = vxor.u32 %v523, 2147483648
  %v525 = vmul.f32 %v524, 1.442695
  %v526 = vpow.pop %v525
  %v527 = vadd.f32 %v526, 1.0
  %v528 = vrcp.pop %v527
  %v529 = vmul.f32 1.0, %v528
  %v530 = vld [vmem:[%s5] sm:$0x1]
  %v532 = vlaneseq
  %v533 = vshrl.u32 %v532, 7
  %v534 = vsub.s32 0, %v533
  %v535 = vrot.slane %v530, %v534
  %v537 = vadd.f32 %v299, %v535
  %v538 = vmul.f32 %v522, %v537
  %v539 = vadd.f32 %v513, %v538
  %v540 = vtanh.pop %v539
  %v541 = vsub.f32 1.0, %v529
  %v542 = vmul.f32 %v541, %v540
  %v543 = vmul.f32 %v529, %v30
  %v544 = vadd.f32 %v542, %v543
  %v545 = vld [vmem:[%s6] sm:$0xff]
  %v546 = vld [vmem:[%s6 + $0x8] sm:$0xff]
  %v547 = vld [vmem:[%s6 + $0x10] sm:$0xff]
  %v548 = vld [vmem:[%s6 + $0x18] sm:$0xff]
  %v549 = vld [vmem:[%s6 + $0x20] sm:$0xff]
  %v550 = vld [vmem:[%s6 + $0x28] sm:$0xff]
  %v551 = vld [vmem:[%s6 + $0x30] sm:$0xff]
  %v552 = vld [vmem:[%s6 + $0x38] sm:$0xff]
  %v553 = vld [vmem:[%s6 + $0x40] sm:$0xff]
  %v554 = vld [vmem:[%s6 + $0x48] sm:$0xff]
  %v555 = vld [vmem:[%s6 + $0x50] sm:$0xff]
  %v556 = vld [vmem:[%s6 + $0x58] sm:$0xff]
  %v557 = vld [vmem:[%s6 + $0x60] sm:$0xff]
  %v558 = vld [vmem:[%s6 + $0x68] sm:$0xff]
  %v559 = vld [vmem:[%s6 + $0x70] sm:$0xff]
  %v560 = vld [vmem:[%s6 + $0x78] sm:$0xff]
  %v561 = vld [vmem:[%s7] sm:$0x1]
  %v563 = vlaneseq
  %v564 = vshrl.u32 %v563, 7
  %v565 = vsub.s32 0, %v564
  %v566 = vrot.slane %v561, %v565
  %568 = vmatprep.subr.mxu0 0.0
  %569 = vmatpush1.msra.mxu0 %v545
  %570 = vmatprep.subr.mxu0 0.0
  %571 = vmatpush1.msra.mxu0 %v546
  %572 = vmatprep.subr.mxu0 0.0
  %573 = vmatpush1.msra.mxu0 %v547
  %574 = vmatprep.subr.mxu0 0.0
  %575 = vmatpush1.msra.mxu0 %v548
  %576 = vmatprep.subr.mxu0 0.0
  %577 = vmatpush1.msra.mxu0 %v549
  %578 = vmatprep.subr.mxu0 0.0
  %579 = vmatpush1.msra.mxu0 %v550
  %580 = vmatprep.subr.mxu0 0.0
  %581 = vmatpush1.msra.mxu0 %v551
  %582 = vmatprep.subr.mxu0 0.0
  %583 = vmatpush1.msra.mxu0 %v552
  %584 = vmatprep.subr.mxu0 0.0
  %585 = vmatpush1.msra.mxu0 %v553
  %586 = vmatprep.subr.mxu0 0.0
  %587 = vmatpush1.msra.mxu0 %v554
  %588 = vmatprep.subr.mxu0 0.0
  %589 = vmatpush1.msra.mxu0 %v555
  %590 = vmatprep.subr.mxu0 0.0
  %591 = vmatpush1.msra.mxu0 %v556
  %592 = vmatprep.subr.mxu0 0.0
  %593 = vmatpush1.msra.mxu0 %v557
  %594 = vmatprep.subr.mxu0 0.0
  %595 = vmatpush1.msra.mxu0 %v558
  %596 = vmatprep.subr.mxu0 0.0
  %597 = vmatpush1.msra.mxu0 %v559
  %598 = vmatprep.subr.mxu0 0.0
  %599 = vmatpush1.msra.mxu0 %v560
  %600 = vmatprep.subr.mxu0 0.0
  %601 = vmatpush1.msra.mxu0 0.0
  %602 = vmatprep.subr.mxu0 0.0
  %603 = vmatpush1.msra.mxu0 0.0
  %604 = vmatprep.subr.mxu0 0.0
  %605 = vmatpush1.msra.mxu0 0.0
  %606 = vmatprep.subr.mxu0 0.0
  %607 = vmatpush1.msra.mxu0 0.0
  %608 = vmatprep.subr.mxu0 0.0
  %609 = vmatpush1.msra.mxu0 0.0
  %610 = vmatprep.subr.mxu0 0.0
  %611 = vmatpush1.msra.mxu0 0.0
  %612 = vmatprep.subr.mxu0 0.0
  %613 = vmatpush1.msra.mxu0 0.0
  %614 = vmatprep.subr.mxu0 0.0
  %615 = vmatpush1.msra.mxu0 0.0
  %616 = vmatprep.subr.mxu0 0.0
  %617 = vmatpush1.msra.mxu0 0.0
  %618 = vmatprep.subr.mxu0 0.0
  %619 = vmatpush1.msra.mxu0 0.0
  %620 = vmatprep.subr.mxu0 0.0
  %621 = vmatpush1.msra.mxu0 0.0
  %622 = vmatprep.subr.mxu0 0.0
  %623 = vmatpush1.msra.mxu0 0.0
  %624 = vmatprep.subr.mxu0 0.0
  %625 = vmatpush1.msra.mxu0 0.0
  %626 = vmatprep.subr.mxu0 0.0
  %627 = vmatpush1.msra.mxu0 0.0
  %628 = vmatprep.subr.mxu0 0.0
  %629 = vmatpush1.msra.mxu0 0.0
  %630 = vmatprep.subr.mxu0 0.0
  %631 = vmatpush1.msra.mxu0 0.0
  %632 = vmatprep.mubr.f32.mxu0 0.0
  %633 = vmatmul.mubr.f32.gmra.mrb[0].mxu0 %v544
  %v634 = vpop.f32.mrb[0].mxu0
  %v635 = vadd.f32 %v566, %v634
  %v636 = vpop.f32.mrb[0].mxu0
  %637 = vdwg.mxu0
  %638 = vst [vmem:[%s8] sm:$0xff] %v544
  %639 = vst [vmem:[%s8 + $0x8] sm:$0xff] %v635
  // Predicated region
  $region34: #{ppo_actor_forward.1} parent=0 // pred_check
    _
  $region35: #{ppo_actor_forward.1} parent=0 // pred_check_branch
    %641 = sbr.rel (0) target = $region37
  $region36: #{ppo_actor_forward.1} parent=0 // pred_region
    _
  $region37: #{ppo_actor_forward.1} parent=0 // pred_fallthru
    _
  // Predicated region
  $region38: #{ppo_actor_forward.1} parent=0 // pred_check
    _
  $region39: #{ppo_actor_forward.1} parent=0 // pred_check_branch
    %643 = sbr.rel (0) target = $region41
  $region40: #{ppo_actor_forward.1} parent=0 // pred_region
    _
  $region41: #{ppo_actor_forward.1} parent=0 // pred_fallthru
    _

</llo_original>
